<compile_context>
chip_gen: v5e
topology: v5e:2x2
jax: 0.10.0
libtpu: 0.0.40
codegen_flags: <defaults>
</compile_context>

<pallas_src>
import jax
import jax.numpy as jnp
from jax.experimental import pallas as pl
from jax.experimental.pallas import tpu as pltpu


def linear_permute_kernel(x_ref, wb_ref, o_ref):
    """Fused F.linear(x, W, b).permute(2, 1, 0).

    x_ref:  (B, S, Din)        VMEM  activations (natural torch layout)
    wb_ref: (Dout*Din + Dout,) SMEM  flat [W row-major ..., bias ...] scalars
    o_ref:  (Dout, S, B)       VMEM  permuted output, single full store
    """
    dout, s, bdim = o_ref.shape
    din = x_ref.shape[-1]

    # One load of the whole input (it is a single padded vreg).
    x = x_ref[...]                                            # (B, S, Din)

    # The only data movement permute(2,1,0) needs: for each input feature d,
    # build X_d[s, b] = x[b, s, d]  (S stays on sublanes, B goes to lanes).
    # Done once per d (2 tiny lane concats total), reused by every output
    # channel below.
    xd = [
        jnp.concatenate([x[b, :, d:d + 1] for b in range(bdim)], axis=-1)  # (S, B)
        for d in range(din)
    ]

    # out[o, s, b] = sum_d W[o, d] * x[b, s, d] + bias[o]
    # Dout (=2) unrolled; each channel is pure VPU broadcast-FMA over the whole
    # (S, B) plane using SMEM scalar weights.  No MXU, no reductions.
    planes = []
    for o in range(dout):
        acc = xd[0] * wb_ref[o * din + 0]
        for d in range(1, din):
            acc = acc + xd[d] * wb_ref[o * din + d]
        planes.append(acc + wb_ref[dout * din + o])           # (S, B)

    # Single full-tensor store of the already-permuted output.
    o_ref[...] = jnp.stack(planes, axis=0).astype(o_ref.dtype)


def model_forward(x1, weight, bias):
    """Equivalent of F.linear(x1, weight, bias).permute(2, 1, 0) as ONE kernel."""
    B, S, Din = x1.shape
    Dout = weight.shape[0]

    # Flatten params into ONE tiny 1-D SMEM operand: [W row-major ..., bias ...].
    wb = jnp.concatenate([weight.reshape(-1), bias]).astype(jnp.float32)

    flops = 2 * B * S * Din * Dout
    bytes_accessed = (
        x1.size * x1.dtype.itemsize
        + wb.size * wb.dtype.itemsize
        + Dout * S * B * x1.dtype.itemsize
    )

    return pl.pallas_call(
        linear_permute_kernel,
        out_shape=jax.ShapeDtypeStruct((Dout, S, B), x1.dtype),
        in_specs=[
            pl.BlockSpec(memory_space=pltpu.MemorySpace.VMEM),   # x1 (whole array)
            pl.BlockSpec(memory_space=pltpu.MemorySpace.SMEM),   # flat [W, bias]
        ],
        out_specs=pl.BlockSpec(memory_space=pltpu.MemorySpace.VMEM),
        cost_estimate=pl.CostEstimate(
            flops=flops, transcendentals=0, bytes_accessed=bytes_accessed),
    )(x1, wb)


if __name__ == "__main__":
    key = jax.random.PRNGKey(0)
    k_x, k_w, k_b = jax.random.split(key, 3)

    B, S, Din, Dout = 2, 3, 2, 2   # nn.Linear(2, 2)

    x1 = jax.random.normal(k_x, (B, S, Din), dtype=jnp.float32)
    # Deterministic parameter init (mimics nn.Linear's uniform(-1/sqrt(Din), +))
    bound = 1.0 / (Din ** 0.5)
    weight = jax.random.uniform(k_w, (Dout, Din), jnp.float32, -bound, bound)
    bias = jax.random.uniform(k_b, (Dout,), jnp.float32, -bound, bound)

    out = jax.block_until_ready(model_forward(x1, weight, bias))

    # Reference (plain JAX) check of linear + permute(2, 1, 0)
    ref = jnp.transpose(x1 @ weight.T + bias, (2, 1, 0))
    assert out.shape == (Dout, S, B)
    assert jnp.allclose(out, ref, atol=1e-5, rtol=1e-5)

    print("KERNEL_OK")
</pallas_src>

<mosaic_0001>
module attributes {stable_mosaic.version = 11 : i64} {
  func.func @linear_permute_kernel(%arg0: memref<2x3x2xf32, #tpu.memory_space<vmem>>, %arg1: memref<6xf32, #tpu.memory_space<smem>>, %arg2: memref<2x3x2xf32, #tpu.memory_space<vmem>>) attributes {dimension_semantics = [], scalar_prefetch = 0 : i64, scratch_operands = 0 : i64, tpu.core_type = #tpu.core_type<tc>} {
    %c0 = arith.constant 0 : index
    %c0_0 = arith.constant 0 : index
    %c0_1 = arith.constant 0 : index
    %0 = vector.load %arg0[%c0, %c0_0, %c0_1] : memref<2x3x2xf32, #tpu.memory_space<vmem>>, vector<2x3x2xf32>
    %1 = vector.extract_strided_slice %0 {offsets = [0, 0, 0], sizes = [1, 3, 1], strides = [1, 1, 1]} : vector<2x3x2xf32> to vector<1x3x1xf32>
    %2 = vector.shape_cast %1 : vector<1x3x1xf32> to vector<3x1xf32>
    %3 = vector.extract_strided_slice %0 {offsets = [1, 0, 0], sizes = [1, 3, 1], strides = [1, 1, 1]} : vector<2x3x2xf32> to vector<1x3x1xf32>
    %4 = vector.shape_cast %3 : vector<1x3x1xf32> to vector<3x1xf32>
    %5 = tpu.concatenate %2, %4 in 1 : vector<3x1xf32>, vector<3x1xf32> -> vector<3x2xf32>
    %6 = vector.extract_strided_slice %0 {offsets = [0, 0, 1], sizes = [1, 3, 1], strides = [1, 1, 1]} : vector<2x3x2xf32> to vector<1x3x1xf32>
    %7 = vector.shape_cast %6 : vector<1x3x1xf32> to vector<3x1xf32>
    %8 = vector.extract_strided_slice %0 {offsets = [1, 0, 1], sizes = [1, 3, 1], strides = [1, 1, 1]} : vector<2x3x2xf32> to vector<1x3x1xf32>
    %9 = vector.shape_cast %8 : vector<1x3x1xf32> to vector<3x1xf32>
    %10 = tpu.concatenate %7, %9 in 1 : vector<3x1xf32>, vector<3x1xf32> -> vector<3x2xf32>
    %c0_2 = arith.constant 0 : index
    %11 = memref.load %arg1[%c0_2] : memref<6xf32, #tpu.memory_space<smem>>
    %12 = vector.broadcast %11 : f32 to vector<3x2xf32>
    %13 = arith.mulf %5, %12 : vector<3x2xf32>
    %c1 = arith.constant 1 : index
    %14 = memref.load %arg1[%c1] : memref<6xf32, #tpu.memory_space<smem>>
    %15 = vector.broadcast %14 : f32 to vector<3x2xf32>
    %16 = arith.mulf %10, %15 : vector<3x2xf32>
    %17 = arith.addf %13, %16 : vector<3x2xf32>
    %c4 = arith.constant 4 : index
    %18 = memref.load %arg1[%c4] : memref<6xf32, #tpu.memory_space<smem>>
    %19 = vector.broadcast %18 : f32 to vector<3x2xf32>
    %20 = arith.addf %17, %19 : vector<3x2xf32>
    %c2 = arith.constant 2 : index
    %21 = memref.load %arg1[%c2] : memref<6xf32, #tpu.memory_space<smem>>
    %22 = vector.broadcast %21 : f32 to vector<3x2xf32>
    %23 = arith.mulf %5, %22 : vector<3x2xf32>
    %c3 = arith.constant 3 : index
    %24 = memref.load %arg1[%c3] : memref<6xf32, #tpu.memory_space<smem>>
    %25 = vector.broadcast %24 : f32 to vector<3x2xf32>
    %26 = arith.mulf %10, %25 : vector<3x2xf32>
    %27 = arith.addf %23, %26 : vector<3x2xf32>
    %c5 = arith.constant 5 : index
    %28 = memref.load %arg1[%c5] : memref<6xf32, #tpu.memory_space<smem>>
    %29 = vector.broadcast %28 : f32 to vector<3x2xf32>
    %30 = arith.addf %27, %29 : vector<3x2xf32>
    %31 = vector.shape_cast %20 : vector<3x2xf32> to vector<1x3x2xf32>
    %32 = vector.shape_cast %30 : vector<3x2xf32> to vector<1x3x2xf32>
    %33 = tpu.concatenate %31, %32 in 0 : vector<1x3x2xf32>, vector<1x3x2xf32> -> vector<2x3x2xf32>
    %c0_3 = arith.constant 0 : index
    %c0_4 = arith.constant 0 : index
    %c0_5 = arith.constant 0 : index
    %34 = vector.load %arg2[%c0_3, %c0_4, %c0_5] : memref<2x3x2xf32, #tpu.memory_space<vmem>>, vector<2x3x2xf32>
    tpu.vector_store %arg2[%c0_3, %c0_4, %c0_5], %33 {strides = array<i32>} : memref<2x3x2xf32, #tpu.memory_space<vmem>>, vector<2x3x2xf32>,
    return
  }
}

</mosaic_0001>

<llo_original>
// kernel: tpu_custom_call.1
$region0: #{tpu_custom_call.1}
  #allocation0 [shape = 'u32[]', space=smem, size = 0x4, offset = 0x4, fixed_abs, tag = 'smem constant byte address 0x4 - core index']
  #allocation1 [shape = 'u32[72,128]{1,0:T(1,128)}', space=vmem, size = 0x9000, scoped, tag = 'internal scratch']
  %s0 = inlined_call_operand.vmem [shape: f32[2,3,2], index: 0, kind: input, shape index: {}]
  %s1 = inlined_call_operand.vmem [shape: f32[6], index: 1, kind: input, shape index: {}]
  %s2 = inlined_call_operand.vmem [shape: f32[2,3,2], index: 2, kind: output, shape index: {}]
  %s3 = sld [smem:[#allocation0]]
  $region22: #{tpu_custom_call.1} parent=0
    _
  %s5 = ssub.s32 1, %s3
  %s6 = scalar_select 0, %s5, %s3
  $region1: #{tpu_custom_call.1} parent=0
    #allocation2 [shape = 'u8[512]{0}', space=smem, size = 0x200, scoped, tag = 'input window, operand 1, single buffered']
    #allocation3 [shape = 's32[1]{0}', space=sflag, size = 0x4, scoped, tag = 'scoped memory for tpu_custom_call.1']
    %7 = vsyncpa [#allocation3], 0
    // Predicated region
    $region2: #{tpu_custom_call.1} parent=1 // pred_check
      _
    $region3: #{tpu_custom_call.1} parent=1 // pred_check_branch
      %9 = sbr.rel (0) target = $region5
    $region4: #{tpu_custom_call.1} parent=1 // pred_region
      _
    $region5: #{tpu_custom_call.1} parent=1 // pred_fallthru
      _
    // Predicated region
    $region6: #{tpu_custom_call.1} parent=1 // pred_check
      _
    $region7: #{tpu_custom_call.1} parent=1 // pred_check_branch
      %11 = sbr.rel (0) target = $region9
    $region8: #{tpu_custom_call.1} parent=1 // pred_region
      %13 = vsyncadd [#allocation3], 0
      %s15 = sshll.u32 %s1, 4
      %s16 = int_to_ptr.vmem [resolvable:$true] %s15
      %18 = dma.vmem_to_smem %s16, 16, [#allocation2], [#allocation3]
    $region9: #{tpu_custom_call.1} parent=1 // pred_fallthru
      _
    // Predicated region
    $region10: #{tpu_custom_call.1} parent=1 // pred_check
      _
    $region11: #{tpu_custom_call.1} parent=1 // pred_check_branch
      %20 = sbr.rel (0) target = $region13
    $region12: #{tpu_custom_call.1} parent=1 // pred_region
      %22 = dma.done [#allocation3], 16
    $region13: #{tpu_custom_call.1} parent=1 // pred_fallthru
      _
    %23 = sfence
    %v24 = vld [vmem:[%s0] sm:$0x7]
    %v25 = vld [vmem:[%s0 + $0x4] sm:$0x7]
    %27 = vrot.lane.b32.xlu0 %v25, 1
    %v28 = vpop.permute.xlu0 %27
    %vm30 = vcmask 7168
    %v31 = vsel %vm30, %v24, %v28
    %33 = vrot.lane.b32.xlu0 %v24, 127
    %v34 = vpop.permute.xlu0 %33
    %v36 = vsel %vm30, %v34, %v25
    %s37 = sld [smem:[#allocation2]]
    %v38 = vstv %s37
    %v39 = vmul.f32 %v31, %v38
    %s40 = sld [smem:[#allocation2 + $0x1]]
    %v41 = vstv %s40
    %v42 = vmul.f32 %v36, %v41
    %v43 = vadd.f32 %v39, %v42
    %s44 = sld [smem:[#allocation2 + $0x4]]
    %v45 = vstv %s44
    %v46 = vadd.f32 %v43, %v45
    %s47 = sld [smem:[#allocation2 + $0x2]]
    %v48 = vstv %s47
    %v49 = vmul.f32 %v31, %v48
    %s50 = sld [smem:[#allocation2 + $0x3]]
    %v51 = vstv %s50
    %v52 = vmul.f32 %v36, %v51
    %v53 = vadd.f32 %v49, %v52
    %s54 = sld [smem:[#allocation2 + $0x5]]
    %v55 = vstv %s54
    %v56 = vadd.f32 %v53, %v55
    %vm57 = vcmask 10240
    %58 = vst.msk [vmem:[%s2] sm:$0x7] %vm57, %v46
    %59 = vst.msk [vmem:[%s2 + $0x4] sm:$0x7] %vm57, %v56
    // Predicated region
    $region14: #{tpu_custom_call.1} parent=1 // pred_check
      _
    $region15: #{tpu_custom_call.1} parent=1 // pred_check_branch
      %61 = sbr.rel (0) target = $region17
    $region16: #{tpu_custom_call.1} parent=1 // pred_region
      _
    $region17: #{tpu_custom_call.1} parent=1 // pred_fallthru
      _
    // Predicated region
    $region18: #{tpu_custom_call.1} parent=1 // pred_check
      _
    $region19: #{tpu_custom_call.1} parent=1 // pred_check_branch
      %63 = sbr.rel (0) target = $region21
    $region20: #{tpu_custom_call.1} parent=1 // pred_region
      _
    $region21: #{tpu_custom_call.1} parent=1 // pred_fallthru
      _
    %64 = vsyncpa [#allocation3], 1

</llo_original>
